<compile_context>
chip_gen: v7x
topology: tpu7x:2x2x1
jax: 0.10.0
libtpu: 0.0.40
codegen_flags: <defaults>
</compile_context>

<pallas_src>
import functools

import jax
import jax.numpy as jnp
from jax.experimental import pallas as pl
from jax.experimental.pallas import tpu as pltpu

# features[0] has dilation 1, then rates = [2, 3, 4] (strid is forced to 1 in __init__)
DILATIONS = (1, 2, 3, 4)
MAXPAD = max(DILATIONS)


def _round_up(x, m):
    return ((x + m - 1) // m) * m


def _lane_chunks(hw):
    """Static (offset, size) chunks over the spatial (lane) axis.

    Chunks are ~HW/8 lanes (>= 512, 128-aligned except possibly the last) so the f32
    pool temporary and the per-chunk scale temporary stay a bounded fraction of the
    streamed block.  Single chunk for small HW.
    """
    if hw <= 512:
        return ((0, hw),)
    step = max(512, -(-hw // 8))
    step = _round_up(step, 128)
    chunks = []
    off = 0
    while off < hw:
        sz = min(step, hw - off)
        chunks.append((off, sz))
        off += sz
    return tuple(chunks)


def eca_kernel(w_ref, x_ref, o_ref, pad_ref, *, hw, lane_chunks):
    """Fused global-pool -> cascaded dilated channel conv -> sigmoid -> scale.

    w_ref   : (4, 3) f32 in SMEM  -- 3-tap weights of the 4 cascaded Conv1d's
    x_ref   : (Bt, C, HW) native dtype in VMEM
    o_ref   : (Bt, C, HW) native dtype in VMEM
    pad_ref : (Bt, C + 2*MAXPAD, 1) f32 VMEM line buffer (channel axis on sublanes)
    hw      : H*W (spatial size)
    """
    bt, c, _ = x_ref.shape
    f32 = jnp.float32

    # 1) Global average pool over the spatial (lane) axis, chunked f32 accumulation
    #    so low-precision inputs never materialize a full-block f32 temporary.
    acc = jnp.zeros((bt, c, 1), f32)
    for off, sz in lane_chunks:
        acc = acc + jnp.sum(x_ref[:, :, off:off + sz].astype(f32),
                            axis=-1, keepdims=True)
    v = acc * (1.0 / hw)                                        # (Bt, C, 1) f32

    # Zero only the halo rows of the line buffer; the center is rewritten each layer,
    # so the halo realizes the conv's zero padding.  Done every grid step (not guarded
    # by program_id == 0) because scratch is per-core: under megacore "parallel"
    # scheduling one core never sees step 0.
    pad_ref[:, :MAXPAD, :] = jnp.zeros((bt, MAXPAD, 1), f32)
    pad_ref[:, MAXPAD + c:, :] = jnp.zeros((bt, MAXPAD, 1), f32)

    # 2) Cascade of 4 dilated 3-tap conv1d's along the channel (sublane) axis.
    #    Center tap reuses the live value: 1 store + 2 halo loads per layer.
    # TODO(synk): replace the line buffer with pltpu.roll + broadcasted_iota masks to
    # drop this scratch entirely once 3-D sublane rolls are confirmed to lower cleanly.
    for f, d in enumerate(DILATIONS):
        pad_ref[:, MAXPAD:MAXPAD + c, :] = v
        w0 = w_ref[f, 0]
        w1 = w_ref[f, 1]
        w2 = w_ref[f, 2]
        vl = pad_ref[:, MAXPAD - d:MAXPAD - d + c, :]   # v[i - d] (zero outside)
        vr = pad_ref[:, MAXPAD + d:MAXPAD + d + c, :]   # v[i + d] (zero outside)
        v = w0 * vl + w1 * v + w2 * vr

    # 3) Sigmoid gate, broadcast scale in the NATIVE dtype (bf16 VALU on v6e/v7x:
    #    one packed mul/element instead of cast-mul-cast).  Chunked over lanes so the
    #    dominant write pass never needs a full-block temporary on top of the streamed
    #    double-buffered input/output.
    attn = jax.nn.sigmoid(v).astype(o_ref.dtype)                # (Bt, C, 1)
    for off, sz in lane_chunks:
        o_ref[:, :, off:off + sz] = x_ref[:, :, off:off + sz] * attn


def cascade_dilated_eca(x, weights):
    """x: (B, C, H, W) float dtype, weights: (4, 3) -> (B, C, H, W), same dtype as x."""
    B, C, H, W = x.shape
    HW = H * W
    xr = x.reshape(B, C, HW)                    # metadata-only, no HBM pass
    itemsize = jnp.dtype(x.dtype).itemsize

    lane_chunks = _lane_chunks(HW)
    chunk_max = max(sz for _, sz in lane_chunks)

    # ---- generation-aware VMEM budget (64 MiB v7x, 128 MiB v5e/v6e) ----
    try:
        vmem_cap = int(pltpu.get_tpu_info().vmem_capacity_bytes)
    except Exception:
        vmem_cap = 64 << 20                     # conservative fallback (v7x per-core)
    usable = max(vmem_cap - (16 << 20), 8 << 20)

    # Live VMEM per batch row in a block:
    #   double-buffered input + double-buffered output (streamed)           4 * stream
    # + f32 pool-chunk temporary                                            C*chunk*4
    # + lane-padded line-buffer scratch ((...,1) physically pads to 128 lanes).
    per_bt_stream = C * HW * itemsize
    per_bt_temp = C * chunk_max * 4
    per_bt_scratch = _round_up(C + 2 * MAXPAD, 8) * 128 * 4
    per_bt_live = 4 * per_bt_stream + per_bt_temp + per_bt_scratch

    bt = max(1, min(B, usable // per_bt_live))

    # Target >= 4 grid steps (>= 2 per v7x TensorCore) so DMA/compute/DMA pipeline,
    # as long as each block keeps >= ~2 MiB of streamed data; otherwise >= 2 steps.
    MIN_BLOCK = 2 << 20
    if B >= 4 and (B // 4) * per_bt_stream >= MIN_BLOCK:
        bt = min(bt, B // 4)
    elif B >= 2:
        bt = min(bt, max(1, B // 2))
    bt = int(bt)

    grid = pl.cdiv(B, bt)                       # non-divisor Bt: trailing block masked

    vmem_limit = int(min(vmem_cap - (2 << 20),
                         max(32 << 20, bt * per_bt_live + (8 << 20))))
    # TODO(synk): if even bt=1 exceeds `usable` (huge C*HW), split HW into a two-phase
    # grid (pool-accumulate pass, then scale pass) instead of one fused pass.

    kernel = functools.partial(eca_kernel, hw=HW, lane_chunks=lane_chunks)
    out = pl.pallas_call(
        kernel,
        out_shape=jax.ShapeDtypeStruct((B, C, HW), x.dtype),
        grid_spec=pltpu.PrefetchScalarGridSpec(
            num_scalar_prefetch=0,
            grid=(grid,),
            in_specs=[
                pl.BlockSpec(memory_space=pltpu.MemorySpace.SMEM),      # conv weights
                pl.BlockSpec((bt, C, HW), lambda b: (b, 0, 0)),         # x blocks
            ],
            out_specs=pl.BlockSpec((bt, C, HW), lambda b: (b, 0, 0)),
            scratch_shapes=[pltpu.VMEM((bt, C + 2 * MAXPAD, 1), jnp.float32)],
        ),
        compiler_params=pltpu.CompilerParams(
            # TODO(synk): confirm on v7x that "parallel" core-shards this axis;
            # otherwise switch to pltpu.CORE_PARALLEL.
            dimension_semantics=("parallel",),
            vmem_limit_bytes=vmem_limit,
        ),
    )(weights.astype(jnp.float32), xr)

    return out.reshape(B, C, H, W)


def reference(x, weights):
    """Pure-JAX reference mirroring the PyTorch forward (bn=False, res=False)."""
    B, C, H, W = x.shape
    v = jnp.mean(x, axis=(2, 3))                                  # (B, C)
    for f, d in enumerate(DILATIONS):
        vp = jnp.pad(v, ((0, 0), (d, d)))
        v = (weights[f, 0] * vp[:, 0:C]
             + weights[f, 1] * vp[:, d:d + C]
             + weights[f, 2] * vp[:, 2 * d:2 * d + C])
    attn = jax.nn.sigmoid(v)[:, :, None, None]
    return x * attn


if __name__ == "__main__":
    key = jax.random.PRNGKey(0)
    kx, kw = jax.random.split(key)

    B, C, H, W = 2, 16, 16, 16
    x = jax.random.normal(kx, (B, C, H, W), dtype=jnp.float32)

    # Deterministic Conv1d(1, 1, k=3, bias=False) weight init (kaiming-uniform style bound).
    bound = 1.0 / (3.0 ** 0.5)
    weights = jax.random.uniform(kw, (4, 3), jnp.float32, -bound, bound)

    # f32 path: exact comparison against the pure-JAX reference.
    out = jax.block_until_ready(cascade_dilated_eca(x, weights))
    ref = reference(x, weights)
    assert out.shape == x.shape and out.dtype == x.dtype
    assert jnp.allclose(out, ref, atol=1e-5, rtol=1e-5), "f32 mismatch vs pure-JAX reference"

    # Native bf16 path: bf16 in -> bf16 out (f32 pool/cascade, native-dtype scale).
    xb = x.astype(jnp.bfloat16)
    out_b = jax.block_until_ready(cascade_dilated_eca(xb, weights))
    assert out_b.shape == x.shape and out_b.dtype == jnp.bfloat16
    ref_b = reference(xb.astype(jnp.float32), weights)
    assert jnp.allclose(out_b.astype(jnp.float32), ref_b, atol=5e-2, rtol=5e-2), "bf16 mismatch"

    print("KERNEL_OK")
</pallas_src>

<mosaic_0001>
module attributes {stable_mosaic.version = 11 : i64} {
  func.func @eca_kernel(%arg0: i32, %arg1: memref<4x3xf32, #tpu.memory_space<smem>>, %arg2: memref<1x16x256xf32, #tpu.memory_space<vmem>>, %arg3: memref<1x16x256xf32, #tpu.memory_space<vmem>>, %arg4: memref<1x24x1xf32, #tpu.memory_space<vmem>>) attributes {dimension_semantics = [#tpu.dimension_semantics<parallel>], iteration_bounds = array<i64: 2>, scalar_prefetch = 0 : i64, scratch_operands = 1 : i64, tpu.core_type = #tpu.core_type<tc>, window_params = [{transform_indices = @transform_0, window_bounds = array<i64: 4, 3>}, {transform_indices = @transform_1, window_bounds = array<i64: 1, 16, 256>}, {transform_indices = @transform_2, window_bounds = array<i64: 1, 16, 256>}]} {
    %cst = arith.constant 0.000000e+00 : f32
    %0 = vector.broadcast %cst : f32 to vector<1x16x1xf32>
    %c0 = arith.constant 0 : index
    %c0_0 = arith.constant 0 : index
    %c0_1 = arith.constant 0 : index
    %1 = vector.load %arg2[%c0, %c0_0, %c0_1] : memref<1x16x256xf32, #tpu.memory_space<vmem>>, vector<1x16x256xf32>
    %cst_2 = arith.constant dense<0.000000e+00> : vector<1x16xf32>
    %2 = vector.multi_reduction <add>, %1, %cst_2 [2] : vector<1x16x256xf32> to vector<1x16xf32>
    %3 = vector.shape_cast %2 : vector<1x16xf32> to vector<1x16x1xf32>
    %4 = arith.addf %0, %3 : vector<1x16x1xf32>
    %cst_3 = arith.constant 3.906250e-03 : f32
    %5 = vector.broadcast %cst_3 : f32 to vector<1x16x1xf32>
    %6 = arith.mulf %4, %5 : vector<1x16x1xf32>
    %cst_4 = arith.constant 0.000000e+00 : f32
    %7 = vector.broadcast %cst_4 : f32 to vector<1x4x1xf32>
    %c0_5 = arith.constant 0 : index
    %c0_6 = arith.constant 0 : index
    %c0_7 = arith.constant 0 : index
    %8 = vector.load %arg4[%c0_5, %c0_6, %c0_7] : memref<1x24x1xf32, #tpu.memory_space<vmem>>, vector<1x4x1xf32>
    tpu.vector_store %arg4[%c0_5, %c0_6, %c0_7], %7 {strides = array<i32>} : memref<1x24x1xf32, #tpu.memory_space<vmem>>, vector<1x4x1xf32>,
    %cst_8 = arith.constant 0.000000e+00 : f32
    %9 = vector.broadcast %cst_8 : f32 to vector<1x4x1xf32>
    %c0_9 = arith.constant 0 : index
    %c20 = arith.constant 20 : index
    %c0_10 = arith.constant 0 : index
    %10 = vector.load %arg4[%c0_9, %c20, %c0_10] : memref<1x24x1xf32, #tpu.memory_space<vmem>>, vector<1x4x1xf32>
    tpu.vector_store %arg4[%c0_9, %c20, %c0_10], %9 {strides = array<i32>} : memref<1x24x1xf32, #tpu.memory_space<vmem>>, vector<1x4x1xf32>,
    %c0_11 = arith.constant 0 : index
    %c4 = arith.constant 4 : index
    %c0_12 = arith.constant 0 : index
    %11 = vector.load %arg4[%c0_11, %c4, %c0_12] : memref<1x24x1xf32, #tpu.memory_space<vmem>>, vector<1x16x1xf32>
    tpu.vector_store %arg4[%c0_11, %c4, %c0_12], %6 {strides = array<i32>} : memref<1x24x1xf32, #tpu.memory_space<vmem>>, vector<1x16x1xf32>,
    %c0_13 = arith.constant 0 : index
    %c0_14 = arith.constant 0 : index
    %12 = memref.load %arg1[%c0_13, %c0_14] : memref<4x3xf32, #tpu.memory_space<smem>>
    %c0_15 = arith.constant 0 : index
    %c1 = arith.constant 1 : index
    %13 = memref.load %arg1[%c0_15, %c1] : memref<4x3xf32, #tpu.memory_space<smem>>
    %c0_16 = arith.constant 0 : index
    %c2 = arith.constant 2 : index
    %14 = memref.load %arg1[%c0_16, %c2] : memref<4x3xf32, #tpu.memory_space<smem>>
    %c0_17 = arith.constant 0 : index
    %c3 = arith.constant 3 : index
    %c0_18 = arith.constant 0 : index
    %15 = vector.load %arg4[%c0_17, %c3, %c0_18] : memref<1x24x1xf32, #tpu.memory_space<vmem>>, vector<1x16x1xf32>
    %c0_19 = arith.constant 0 : index
    %c5 = arith.constant 5 : index
    %c0_20 = arith.constant 0 : index
    %16 = vector.load %arg4[%c0_19, %c5, %c0_20] : memref<1x24x1xf32, #tpu.memory_space<vmem>>, vector<1x16x1xf32>
    %17 = vector.broadcast %12 : f32 to vector<1x16x1xf32>
    %18 = arith.mulf %17, %15 : vector<1x16x1xf32>
    %19 = vector.broadcast %13 : f32 to vector<1x16x1xf32>
    %20 = arith.mulf %19, %6 : vector<1x16x1xf32>
    %21 = arith.addf %18, %20 : vector<1x16x1xf32>
    %22 = vector.broadcast %14 : f32 to vector<1x16x1xf32>
    %23 = arith.mulf %22, %16 : vector<1x16x1xf32>
    %24 = arith.addf %21, %23 : vector<1x16x1xf32>
    %c0_21 = arith.constant 0 : index
    %c4_22 = arith.constant 4 : index
    %c0_23 = arith.constant 0 : index
    %25 = vector.load %arg4[%c0_21, %c4_22, %c0_23] : memref<1x24x1xf32, #tpu.memory_space<vmem>>, vector<1x16x1xf32>
    tpu.vector_store %arg4[%c0_21, %c4_22, %c0_23], %24 {strides = array<i32>} : memref<1x24x1xf32, #tpu.memory_space<vmem>>, vector<1x16x1xf32>,
    %c1_24 = arith.constant 1 : index
    %c0_25 = arith.constant 0 : index
    %26 = memref.load %arg1[%c1_24, %c0_25] : memref<4x3xf32, #tpu.memory_space<smem>>
    %c1_26 = arith.constant 1 : index
    %c1_27 = arith.constant 1 : index
    %27 = memref.load %arg1[%c1_26, %c1_27] : memref<4x3xf32, #tpu.memory_space<smem>>
    %c1_28 = arith.constant 1 : index
    %c2_29 = arith.constant 2 : index
    %28 = memref.load %arg1[%c1_28, %c2_29] : memref<4x3xf32, #tpu.memory_space<smem>>
    %c0_30 = arith.constant 0 : index
    %c2_31 = arith.constant 2 : index
    %c0_32 = arith.constant 0 : index
    %29 = vector.load %arg4[%c0_30, %c2_31, %c0_32] : memref<1x24x1xf32, #tpu.memory_space<vmem>>, vector<1x16x1xf32>
    %c0_33 = arith.constant 0 : index
    %c6 = arith.constant 6 : index
    %c0_34 = arith.constant 0 : index
    %30 = vector.load %arg4[%c0_33, %c6, %c0_34] : memref<1x24x1xf32, #tpu.memory_space<vmem>>, vector<1x16x1xf32>
    %31 = vector.broadcast %26 : f32 to vector<1x16x1xf32>
    %32 = arith.mulf %31, %29 : vector<1x16x1xf32>
    %33 = vector.broadcast %27 : f32 to vector<1x16x1xf32>
    %34 = arith.mulf %33, %24 : vector<1x16x1xf32>
    %35 = arith.addf %32, %34 : vector<1x16x1xf32>
    %36 = vector.broadcast %28 : f32 to vector<1x16x1xf32>
    %37 = arith.mulf %36, %30 : vector<1x16x1xf32>
    %38 = arith.addf %35, %37 : vector<1x16x1xf32>
    %c0_35 = arith.constant 0 : index
    %c4_36 = arith.constant 4 : index
    %c0_37 = arith.constant 0 : index
    %39 = vector.load %arg4[%c0_35, %c4_36, %c0_37] : memref<1x24x1xf32, #tpu.memory_space<vmem>>, vector<1x16x1xf32>
    tpu.vector_store %arg4[%c0_35, %c4_36, %c0_37], %38 {strides = array<i32>} : memref<1x24x1xf32, #tpu.memory_space<vmem>>, vector<1x16x1xf32>,
    %c2_38 = arith.constant 2 : index
    %c0_39 = arith.constant 0 : index
    %40 = memref.load %arg1[%c2_38, %c0_39] : memref<4x3xf32, #tpu.memory_space<smem>>
    %c2_40 = arith.constant 2 : index
    %c1_41 = arith.constant 1 : index
    %41 = memref.load %arg1[%c2_40, %c1_41] : memref<4x3xf32, #tpu.memory_space<smem>>
    %c2_42 = arith.constant 2 : index
    %c2_43 = arith.constant 2 : index
    %42 = memref.load %arg1[%c2_42, %c2_43] : memref<4x3xf32, #tpu.memory_space<smem>>
    %c0_44 = arith.constant 0 : index
    %c1_45 = arith.constant 1 : index
    %c0_46 = arith.constant 0 : index
    %43 = vector.load %arg4[%c0_44, %c1_45, %c0_46] : memref<1x24x1xf32, #tpu.memory_space<vmem>>, vector<1x16x1xf32>
    %c0_47 = arith.constant 0 : index
    %c7 = arith.constant 7 : index
    %c0_48 = arith.constant 0 : index
    %44 = vector.load %arg4[%c0_47, %c7, %c0_48] : memref<1x24x1xf32, #tpu.memory_space<vmem>>, vector<1x16x1xf32>
    %45 = vector.broadcast %40 : f32 to vector<1x16x1xf32>
    %46 = arith.mulf %45, %43 : vector<1x16x1xf32>
    %47 = vector.broadcast %41 : f32 to vector<1x16x1xf32>
    %48 = arith.mulf %47, %38 : vector<1x16x1xf32>
    %49 = arith.addf %46, %48 : vector<1x16x1xf32>
    %50 = vector.broadcast %42 : f32 to vector<1x16x1xf32>
    %51 = arith.mulf %50, %44 : vector<1x16x1xf32>
    %52 = arith.addf %49, %51 : vector<1x16x1xf32>
    %c0_49 = arith.constant 0 : index
    %c4_50 = arith.constant 4 : index
    %c0_51 = arith.constant 0 : index
    %53 = vector.load %arg4[%c0_49, %c4_50, %c0_51] : memref<1x24x1xf32, #tpu.memory_space<vmem>>, vector<1x16x1xf32>
    tpu.vector_store %arg4[%c0_49, %c4_50, %c0_51], %52 {strides = array<i32>} : memref<1x24x1xf32, #tpu.memory_space<vmem>>, vector<1x16x1xf32>,
    %c3_52 = arith.constant 3 : index
    %c0_53 = arith.constant 0 : index
    %54 = memref.load %arg1[%c3_52, %c0_53] : memref<4x3xf32, #tpu.memory_space<smem>>
    %c3_54 = arith.constant 3 : index
    %c1_55 = arith.constant 1 : index
    %55 = memref.load %arg1[%c3_54, %c1_55] : memref<4x3xf32, #tpu.memory_space<smem>>
    %c3_56 = arith.constant 3 : index
    %c2_57 = arith.constant 2 : index
    %56 = memref.load %arg1[%c3_56, %c2_57] : memref<4x3xf32, #tpu.memory_space<smem>>
    %c0_58 = arith.constant 0 : index
    %c0_59 = arith.constant 0 : index
    %c0_60 = arith.constant 0 : index
    %57 = vector.load %arg4[%c0_58, %c0_59, %c0_60] : memref<1x24x1xf32, #tpu.memory_space<vmem>>, vector<1x16x1xf32>
    %c0_61 = arith.constant 0 : index
    %c8 = arith.constant 8 : index
    %c0_62 = arith.constant 0 : index
    %58 = vector.load %arg4[%c0_61, %c8, %c0_62] : memref<1x24x1xf32, #tpu.memory_space<vmem>>, vector<1x16x1xf32>
    %59 = vector.broadcast %54 : f32 to vector<1x16x1xf32>
    %60 = arith.mulf %59, %57 : vector<1x16x1xf32>
    %61 = vector.broadcast %55 : f32 to vector<1x16x1xf32>
    %62 = arith.mulf %61, %52 : vector<1x16x1xf32>
    %63 = arith.addf %60, %62 : vector<1x16x1xf32>
    %64 = vector.broadcast %56 : f32 to vector<1x16x1xf32>
    %65 = arith.mulf %64, %58 : vector<1x16x1xf32>
    %66 = arith.addf %63, %65 : vector<1x16x1xf32>
    %67 = arith.negf %66 : vector<1x16x1xf32>
    %68 = math.exp %67 : vector<1x16x1xf32>
    %cst_63 = arith.constant 1.000000e+00 : f32
    %69 = vector.broadcast %cst_63 : f32 to vector<1x16x1xf32>
    %70 = arith.addf %69, %68 : vector<1x16x1xf32>
    %71 = arith.divf %69, %70 : vector<1x16x1xf32>
    %c0_64 = arith.constant 0 : index
    %c0_65 = arith.constant 0 : index
    %c0_66 = arith.constant 0 : index
    %72 = vector.load %arg2[%c0_64, %c0_65, %c0_66] : memref<1x16x256xf32, #tpu.memory_space<vmem>>, vector<1x16x256xf32>
    %73 = vector.broadcast %71 : vector<1x16x1xf32> to vector<1x16x256xf32>
    %74 = arith.mulf %72, %73 : vector<1x16x256xf32>
    %c0_67 = arith.constant 0 : index
    %c0_68 = arith.constant 0 : index
    %c0_69 = arith.constant 0 : index
    %75 = vector.load %arg3[%c0_67, %c0_68, %c0_69] : memref<1x16x256xf32, #tpu.memory_space<vmem>>, vector<1x16x256xf32>
    tpu.vector_store %arg3[%c0_67, %c0_68, %c0_69], %74 {strides = array<i32>} : memref<1x16x256xf32, #tpu.memory_space<vmem>>, vector<1x16x256xf32>,
    return
  }
  func.func @transform_0(%arg0: i32) -> (i32, i32) {
    %c0_i32 = arith.constant 0 : i32
    %c0_i32_0 = arith.constant 0 : i32
    %c0_i32_1 = arith.constant 0 : i32
    return %c0_i32, %c0_i32_0 : i32, i32
  }
  func.func @transform_1(%arg0: i32) -> (i32, i32, i32) {
    %c0_i32 = arith.constant 0 : i32
    %c0_i32_0 = arith.constant 0 : i32
    %c0_i32_1 = arith.constant 0 : i32
    return %arg0, %c0_i32, %c0_i32_0 : i32, i32, i32
  }
  func.func @transform_2(%arg0: i32) -> (i32, i32, i32) {
    %c0_i32 = arith.constant 0 : i32
    %c0_i32_0 = arith.constant 0 : i32
    %c0_i32_1 = arith.constant 0 : i32
    return %arg0, %c0_i32, %c0_i32_0 : i32, i32, i32
  }
}

</mosaic_0001>

<llo_original>
// kernel: tpu_custom_call.1
$region0: #{tpu_custom_call.1}
  #allocation0 [shape = 'u32[]', space=smem, size = 0x4, offset = 0x4, fixed_abs, tag = 'smem constant byte address 0x4 - core index']
  #allocation1 [shape = 'u32[144,128]{1,0:T(1,128)}', space=vmem, size = 0x12000, scoped, tag = 'internal scratch']
  #allocation2 [shape = 'f32[1,24,1]{2,1,0:T(8,128)}', space=vmem, size = 0x3000, scoped, tag = 'scratch operand']
  %s0 = inlined_call_operand.hbm [shape: f32[4,3], index: 0, kind: input, shape index: {}]
  %s1 = inlined_call_operand.hbm [shape: f32[2,16,256], index: 1, kind: input, shape index: {}]
  %s2 = inlined_call_operand.hbm [shape: f32[2,16,256], index: 2, kind: output, shape index: {}]
  %s3 = sld [smem:[#allocation0]]
  $region49: #{tpu_custom_call.1} parent=0
    _
  %s5 = ssub.s32 1, %s3
  %s6 = scalar_select 0, %s5, %s3
  $region1: #{tpu_custom_call.1} parent=0
    #allocation3 [shape = 'u8[2048]{0}', space=smem, size = 0x800, scoped, tag = 'input window, operand 0, single buffered']
    #allocation4 [shape = 's32[2]{0}', space=sflag, size = 0x8, scoped, tag = 'scoped memory for tpu_custom_call.1']
    #allocation5 [shape = 's32[2]{0}', space=sflag, size = 0x8, scoped, tag = 'scoped memory for tpu_custom_call.1']
    #allocation6 [shape = 's32[2]{0}', space=sflag, size = 0x8, scoped, tag = 'scoped memory for tpu_custom_call.1']
    #allocation7 [shape = 'u8[32768]{0}', space=vmem, size = 0x8000, scoped, tag = 'input window, operand 1']
    #allocation8 [shape = 'u8[32768]{0}', space=vmem, size = 0x8000, scoped, tag = 'output window, operand 0']
    %7 = vsyncpa [#allocation6], 0
    %8 = vsyncpa [#allocation4], 0
    %s9 = scalar_lea.sflag [#allocation4], 1
    %10 = vsyncpa %s9, 0
    %11 = vsyncpa [#allocation5], 0
    %s12 = scalar_lea.sflag [#allocation5], 1
    %13 = vsyncpa %s12, 0
    loop: start=0, step=1, limit=4
    $region2: #{tpu_custom_call.1} parent=1 // loop_pre_header
      _
    $region3: #{tpu_custom_call.1} parent=1 // loop_header
      %s15 = sphi 0, %s19
      %p16 = scmp.ge.s32.totalorder %s15, 4
      %s23 = sphi 0, %s23
      %s25 = sphi 0, %s23
      %s26 = sphi 0, %s25
      %s40 = sphi 0, %s26
      %s46 = sphi 0, %s48
      %s49 = sphi 0, %s46
      %s50 = sphi 0, %s49
      %s66 = sphi 0, %s50
      %s72 = sphi 0, %s74
      %s75 = sphi 0, %s72
      %s76 = sphi 0, %s75
      %s92 = sphi 0, %s76
    $region4: #{tpu_custom_call.1} parent=1 // loop_header_branch
      %18 = sbr.rel (%p16) target = $region8
    $region5: #{tpu_custom_call.1} parent=1 // loop_body
      %s20 = ssub.s32 %s15, 1
      %s21 = ssub.s32 %s15, 2
      %s22 = sadd.s32 %s15, 1
      %s24 = sadd.s32 %s23, 1
      %p27 = scmp.eq.s32.totalorder %s15, 1
      %p28 = scmp.ne.s32.totalorder %s23, %s25
      %p29 = scmp.eq.s32.totalorder %s15, 0
      %p30 = por %p28, %p29
      %p31 = scmp.ne.s32.totalorder %s23, %s25
      %p32 = scmp.eq.s32.totalorder %s20, 1
      %p33 = por %p31, %p32
      %p34 = scmp.ne.s32.totalorder %s25, %s26
      %p35 = scmp.eq.s32.totalorder %s20, 0
      %p36 = por %p34, %p35
      %p37 = scmp.ne.s32.totalorder %s25, %s26
      %p38 = scmp.eq.s32.totalorder %s21, 1
      %p39 = por %p37, %p38
      %p41 = scmp.ne.s32.totalorder %s26, %s40
      %p42 = scmp.eq.s32.totalorder %s21, 0
      %p43 = por %p41, %p42
      %s44 = ssub.s32 %s15, %s22
      %p45 = scmp.eq.s32.totalorder %s44, 0
      %s47 = sadd.s32 %s46, 1
      %s48 = scalar_select %p45, %s46, %s47
      %p51 = pneg %p45
      %p52 = scmp.eq.s32.totalorder %s15, 1
      %p53 = por %p51, %p52
      %p54 = scmp.ne.s32.totalorder %s46, %s49
      %p55 = scmp.eq.s32.totalorder %s15, 0
      %p56 = por %p54, %p55
      %p57 = scmp.ne.s32.totalorder %s46, %s49
      %p58 = scmp.eq.s32.totalorder %s20, 1
      %p59 = por %p57, %p58
      %p60 = scmp.ne.s32.totalorder %s49, %s50
      %p61 = scmp.eq.s32.totalorder %s20, 0
      %p62 = por %p60, %p61
      %p63 = scmp.ne.s32.totalorder %s49, %s50
      %p64 = scmp.eq.s32.totalorder %s21, 1
      %p65 = por %p63, %p64
      %p67 = scmp.ne.s32.totalorder %s50, %s66
      %p68 = scmp.eq.s32.totalorder %s21, 0
      %p69 = por %p67, %p68
      %s70 = ssub.s32 %s15, %s22
      %p71 = scmp.eq.s32.totalorder %s70, 0
      %s73 = sadd.s32 %s72, 1
      %s74 = scalar_select %p71, %s72, %s73
      %p77 = pneg %p71
      %p78 = scmp.eq.s32.totalorder %s15, 1
      %p79 = por %p77, %p78
      %p80 = scmp.ne.s32.totalorder %s72, %s75
      %p81 = scmp.eq.s32.totalorder %s15, 0
      %p82 = por %p80, %p81
      %p83 = scmp.ne.s32.totalorder %s72, %s75
      %p84 = scmp.eq.s32.totalorder %s20, 1
      %p85 = por %p83, %p84
      %p86 = scmp.ne.s32.totalorder %s75, %s76
      %p87 = scmp.eq.s32.totalorder %s20, 0
      %p88 = por %p86, %p87
      %p89 = scmp.ne.s32.totalorder %s75, %s76
      %p90 = scmp.eq.s32.totalorder %s21, 1
      %p91 = por %p89, %p90
      %p93 = scmp.ne.s32.totalorder %s76, %s92
      %p94 = scmp.eq.s32.totalorder %s21, 0
      %p95 = por %p93, %p94
      %p96 = scmp.le.s32.totalorder 1, %s15
      %p97 = scmp.lt.s32.totalorder %s15, 3
      %p98 = pnand %p96, %p97
      %p99 = pneg %p98
      // Predicated region
      $region9: #{tpu_custom_call.1} parent=5 // pred_check
        _
      $region10: #{tpu_custom_call.1} parent=5 // pred_check_branch
        %101 = sbr.rel (%p98) target = $region12
      $region11: #{tpu_custom_call.1} parent=5 // pred_region
        %s102 = ssub.s32 %s15, 1
        // Predicated region
        $region13: #{tpu_custom_call.1} parent=11 // pred_check
          %p103 = pneg %p36
        $region14: #{tpu_custom_call.1} parent=11 // pred_check_branch
          %105 = sbr.rel (%p103) target = $region16
        $region15: #{tpu_custom_call.1} parent=11 // pred_region
          %s107 = ssub.s32 64, 64
          %108 = vsyncadd [#allocation6], %s107
          %111 = dma.hbm_to_smem %s0, 64, [#allocation3], [#allocation6]
        $region16: #{tpu_custom_call.1} parent=11 // pred_fallthru
          _
      $region12: #{tpu_custom_call.1} parent=5 // pred_fallthru
        _
      %p112 = scmp.lt.s32.totalorder %s15, 2
      // Predicated region
      $region17: #{tpu_custom_call.1} parent=5 // pred_check
        %p113 = pneg %p112
      $region18: #{tpu_custom_call.1} parent=5 // pred_check_branch
        %115 = sbr.rel (%p113) target = $region20
      $region19: #{tpu_custom_call.1} parent=5 // pred_region
        // Predicated region
        $region21: #{tpu_custom_call.1} parent=19 // pred_check
          %p116 = pneg %p56
        $region22: #{tpu_custom_call.1} parent=19 // pred_check_branch
          %118 = sbr.rel (%p116) target = $region24
        $region23: #{tpu_custom_call.1} parent=19 // pred_region
          %s119 = sand.u32 %s46, 1
          %s120 = scalar_lea.sflag [#allocation4], %s119
          %s121 = sand.u32 %s46, 1
          %s122 = smul.addr %s121, 32
          %s123 = scalar_lea.vmem [#allocation7], %s122
          %s125 = ssub.s32 512, 512
          %126 = vsyncadd %s120, %s125
          %s127 = smul.addr %s15, 4
          %s128 = smul.addr %s127, 128
          %s129 = scalar_lea.hbm %s1, %s128
          %s130 = sshll.u32 %s123, 4
          %s131 = int_to_ptr.vmem [resolvable:$true] %s130
          %136 = dma.hbm_to_vmem [thread:$0]  %s129, 512, %s131, %s120, 256, 256, 16
        $region24: #{tpu_custom_call.1} parent=19 // pred_fallthru
          _
      $region20: #{tpu_custom_call.1} parent=5 // pred_fallthru
        _
      %p137 = scmp.le.s32.totalorder 1, %s15
      %p138 = scmp.lt.s32.totalorder %s15, 3
      %p139 = pnand %p137, %p138
      %p140 = pneg %p139
      // Predicated region
      $region25: #{tpu_custom_call.1} parent=5 // pred_check
        _
      $region26: #{tpu_custom_call.1} parent=5 // pred_check_branch
        %142 = sbr.rel (%p139) target = $region28
      $region27: #{tpu_custom_call.1} parent=5 // pred_region
        %s143 = ssub.s32 %s15, 1
        // Predicated region
        $region29: #{tpu_custom_call.1} parent=27 // pred_check
          %p144 = pneg %p36
        $region30: #{tpu_custom_call.1} parent=27 // pred_check_branch
          %146 = sbr.rel (%p144) target = $region32
        $region31: #{tpu_custom_call.1} parent=27 // pred_region
          %147 = dma.done [#allocation6], 64
        $region32: #{tpu_custom_call.1} parent=27 // pred_fallthru
          _
        %s148 = sand.u32 %s49, 1
        %s149 = scalar_lea.sflag [#allocation4], %s148
        %s150 = sand.u32 %s49, 1
        %s151 = smul.addr %s150, 32
        %s152 = scalar_lea.vmem [#allocation7], %s151
        // Predicated region
        $region33: #{tpu_custom_call.1} parent=27 // pred_check
          %p153 = pneg %p62
        $region34: #{tpu_custom_call.1} parent=27 // pred_check_branch
          %155 = sbr.rel (%p153) target = $region36
        $region35: #{tpu_custom_call.1} parent=27 // pred_region
          %156 = dma.done %s149, 512
        $region36: #{tpu_custom_call.1} parent=27 // pred_fallthru
          _
        %157 = sfence
        %p158 = pneg %p36
        %p159 = pneg %p33
        %s160 = sand.u32 %s49, 1
        %s161 = scalar_lea.sflag [#allocation4], %s160
        %s162 = sand.u32 %s49, 1
        %s163 = smul.addr %s162, 32
        %s164 = scalar_lea.vmem [#allocation7], %s163
        %p165 = pneg %p62
        %p166 = pneg %p59
        %p167 = pneg %p88
        %p168 = pneg %p85
        %s169 = sand.u32 %s75, 1
        %s170 = scalar_lea.sflag [#allocation5], %s169
        %s171 = sand.u32 %s75, 1
        %s172 = smul.addr %s171, 32
        %s173 = scalar_lea.vmem [#allocation8], %s172
        %v174 = vld [vmem:[%s152] sm:$0xff]
        %v175 = vld [vmem:[%s152 + $0x8] sm:$0xff]
        %v176 = vld [vmem:[%s152 + $0x10] sm:$0xff]
        %v177 = vld [vmem:[%s152 + $0x18] sm:$0xff]
        %v178 = vadd.f32 %v174, %v175
        %179 = vadd.xlane.f32.xlu0 %v178
        %v180 = vpop.xlane.xlu0 %179
        %v181 = vadd.f32 %v176, %v177
        %182 = vadd.xlane.f32.xlu0 %v181
        %v183 = vpop.xlane.xlu0 %182
        %v184 = vadd.f32 %v180, 0.0
        %v185 = vadd.f32 %v183, 0.0
        %v186 = vmul.f32 %v184, 0.00390625
        %v187 = vmul.f32 %v185, 0.00390625
        %vm188 = vcmask 3072
        %189 = vst.msk [vmem:[#allocation2] sm:$0xf] %vm188, 0.0
        %190 = vst.msk [vmem:[#allocation2 + $0x14] sm:$0xf] %vm188, 0.0
        %vm191 = vcmask 7168
        %192 = vst.msk [vmem:[#allocation2 + $0x4] sm:$0xff] %vm191, %v186
        %193 = vst.msk [vmem:[#allocation2 + $0xc] sm:$0xff] %vm191, %v187
        %s194 = sld [smem:[#allocation3]]
        %s195 = sld [smem:[#allocation3 + $0x1]]
        %s196 = sld [smem:[#allocation3 + $0x2]]
        %v197 = vld [vmem:[#allocation2 + $0x3] sm:$0xff]
        %v198 = vld [vmem:[#allocation2 + $0xb] sm:$0xff]
        %v199 = vld [vmem:[#allocation2 + $0x5] sm:$0xff]
        %v200 = vld [vmem:[#allocation2 + $0xd] sm:$0xff]
        %v201 = vstv %s194
        %v202 = vmul.f32 %v201, %v197
        %v203 = vmul.f32 %v201, %v198
        %v204 = vstv %s195
        %v205 = vmul.f32 %v204, %v186
        %v206 = vmul.f32 %v204, %v187
        %v207 = vadd.f32 %v202, %v205
        %v208 = vadd.f32 %v203, %v206
        %v209 = vstv %s196
        %v210 = vmul.f32 %v209, %v199
        %v211 = vmul.f32 %v209, %v200
        %v212 = vadd.f32 %v207, %v210
        %v213 = vadd.f32 %v208, %v211
        %214 = vst.msk [vmem:[#allocation2 + $0x4] sm:$0xff] %vm191, %v212
        %215 = vst.msk [vmem:[#allocation2 + $0xc] sm:$0xff] %vm191, %v213
        %s216 = sld [smem:[#allocation3 + $0x80]]
        %s217 = sld [smem:[#allocation3 + $0x81]]
        %s218 = sld [smem:[#allocation3 + $0x82]]
        %v219 = vld [vmem:[#allocation2 + $0x2] sm:$0xff]
        %v220 = vld [vmem:[#allocation2 + $0xa] sm:$0xff]
        %v221 = vld [vmem:[#allocation2 + $0x6] sm:$0xff]
        %v222 = vld [vmem:[#allocation2 + $0xe] sm:$0xff]
        %v223 = vstv %s216
        %v224 = vmul.f32 %v223, %v219
        %v225 = vmul.f32 %v223, %v220
        %v226 = vstv %s217
        %v227 = vmul.f32 %v226, %v212
        %v228 = vmul.f32 %v226, %v213
        %v229 = vadd.f32 %v224, %v227
        %v230 = vadd.f32 %v225, %v228
        %v231 = vstv %s218
        %v232 = vmul.f32 %v231, %v221
        %v233 = vmul.f32 %v231, %v222
        %v234 = vadd.f32 %v229, %v232
        %v235 = vadd.f32 %v230, %v233
        %236 = vst.msk [vmem:[#allocation2 + $0x4] sm:$0xff] %vm191, %v234
        %237 = vst.msk [vmem:[#allocation2 + $0xc] sm:$0xff] %vm191, %v235
        %s238 = sld [smem:[#allocation3 + $0x100]]
        %s239 = sld [smem:[#allocation3 + $0x101]]
        %s240 = sld [smem:[#allocation3 + $0x102]]
        %v241 = vld [vmem:[#allocation2 + $0x1] sm:$0xff]
        %v242 = vld [vmem:[#allocation2 + $0x9] sm:$0xff]
        %v243 = vld [vmem:[#allocation2 + $0x7] sm:$0xff]
        %v244 = vld [vmem:[#allocation2 + $0xf] sm:$0xff]
        %v245 = vstv %s238
        %v246 = vmul.f32 %v245, %v241
        %v247 = vmul.f32 %v245, %v242
        %v248 = vstv %s239
        %v249 = vmul.f32 %v248, %v234
        %v250 = vmul.f32 %v248, %v235
        %v251 = vadd.f32 %v246, %v249
        %v252 = vadd.f32 %v247, %v250
        %v253 = vstv %s240
        %v254 = vmul.f32 %v253, %v243
        %v255 = vmul.f32 %v253, %v244
        %v256 = vadd.f32 %v251, %v254
        %v257 = vadd.f32 %v252, %v255
        %258 = vst.msk [vmem:[#allocation2 + $0x4] sm:$0xff] %vm191, %v256
        %259 = vst.msk [vmem:[#allocation2 + $0xc] sm:$0xff] %vm191, %v257
        %s260 = sld [smem:[#allocation3 + $0x180]]
        %s261 = sld [smem:[#allocation3 + $0x181]]
        %s262 = sld [smem:[#allocation3 + $0x182]]
        %v263 = vld [vmem:[#allocation2] sm:$0xff]
        %v264 = vld [vmem:[#allocation2 + $0x8] sm:$0xff]
        %v265 = vld [vmem:[#allocation2 + $0x10] sm:$0xff]
        %v266 = vstv %s260
        %v267 = vmul.f32 %v266, %v263
        %v268 = vmul.f32 %v266, %v264
        %v269 = vstv %s261
        %v270 = vmul.f32 %v269, %v256
        %v271 = vmul.f32 %v269, %v257
        %v272 = vadd.f32 %v267, %v270
        %v273 = vadd.f32 %v268, %v271
        %v274 = vstv %s262
        %v275 = vmul.f32 %v274, %v264
        %v276 = vmul.f32 %v274, %v265
        %v277 = vadd.f32 %v272, %v275
        %v278 = vadd.f32 %v273, %v276
        %v279 = vxor.u32 %v277, 2147483648
        %v280 = vxor.u32 %v278, 2147483648
        %v281 = vmul.f32 %v279, 1.442695
        %v282 = vpow.pop %v281
        %v283 = vmul.f32 %v280, 1.442695
        %v284 = vpow.pop %v283
        %v285 = vadd.f32 %v282, 1.0
        %v286 = vadd.f32 %v284, 1.0
        %v287 = vrcp.pop %v285
        %v288 = vmul.f32 1.0, %v287
        %v289 = vrcp.pop %v286
        %v290 = vmul.f32 1.0, %v289
        %v291 = vld [vmem:[%s152] sm:$0xff]
        %v292 = vld [vmem:[%s152 + $0x8] sm:$0xff]
        %v293 = vld [vmem:[%s152 + $0x10] sm:$0xff]
        %v294 = vld [vmem:[%s152 + $0x18] sm:$0xff]
        %296 = vset.pattern.permute.xlu0 0
        %297 = vperm.xlu0 %296, %v288
        %v298 = vpop.permute.xlu0 %297
        %301 = vset.pattern.permute.xlu0 0
        %302 = vperm.xlu0 %301, %v290
        %v303 = vpop.permute.xlu0 %302
        %v305 = vmul.f32 %v291, %v298
        %v306 = vmul.f32 %v292, %v298
        %v307 = vmul.f32 %v293, %v303
        %v308 = vmul.f32 %v294, %v303
        %309 = vst [vmem:[%s173] sm:$0xff] %v305
        %310 = vst [vmem:[%s173 + $0x8] sm:$0xff] %v306
        %311 = vst [vmem:[%s173 + $0x10] sm:$0xff] %v307
        %312 = vst [vmem:[%s173 + $0x18] sm:$0xff] %v308
        %s313 = sand.u32 %s75, 1
        %s314 = scalar_lea.sflag [#allocation5], %s313
        %s315 = sand.u32 %s75, 1
        %s316 = smul.addr %s315, 32
        %s317 = scalar_lea.vmem [#allocation8], %s316
        // Predicated region
        $region37: #{tpu_custom_call.1} parent=27 // pred_check
          %p318 = pneg %p85
        $region38: #{tpu_custom_call.1} parent=27 // pred_check_branch
          %320 = sbr.rel (%p318) target = $region40
        $region39: #{tpu_custom_call.1} parent=27 // pred_region
          %s322 = ssub.s32 512, 512
          %323 = vsyncadd %s314, %s322
          %s324 = smul.addr %s20, 4
          %s325 = smul.addr %s324, 128
          %s326 = scalar_lea.hbm %s2, %s325
          %s327 = sshll.u32 %s317, 4
          %s328 = int_to_ptr.vmem [resolvable:$true] %s327
          %333 = dma.vmem_to_hbm [thread:$0]  %s328, 512, %s326, %s314, 256, 256, 16
        $region40: #{tpu_custom_call.1} parent=27 // pred_fallthru
          _
      $region28: #{tpu_custom_call.1} parent=5 // pred_fallthru
        _
      %p334 = scmp.le.s32.totalorder 2, %s15
      // Predicated region
      $region41: #{tpu_custom_call.1} parent=5 // pred_check
        %p335 = pneg %p334
      $region42: #{tpu_custom_call.1} parent=5 // pred_check_branch
        %337 = sbr.rel (%p335) target = $region44
      $region43: #{tpu_custom_call.1} parent=5 // pred_region
        %s338 = ssub.s32 %s15, 2
        // Predicated region
        $region45: #{tpu_custom_call.1} parent=43 // pred_check
          %p339 = pneg %p91
        $region46: #{tpu_custom_call.1} parent=43 // pred_check_branch
          %341 = sbr.rel (%p339) target = $region48
        $region47: #{tpu_custom_call.1} parent=43 // pred_region
          %s342 = sand.u32 %s76, 1
          %s343 = scalar_lea.sflag [#allocation5], %s342
          %s344 = sand.u32 %s76, 1
          %s345 = smul.addr %s344, 32
          %s346 = scalar_lea.vmem [#allocation8], %s345
          %347 = dma.done %s343, 512
        $region48: #{tpu_custom_call.1} parent=43 // pred_fallthru
          _
      $region44: #{tpu_custom_call.1} parent=5 // pred_fallthru
        _
    $region6: #{tpu_custom_call.1} parent=1 // loop_footer
      %s19 = sadd.s32 1, %s15
    $region7: #{tpu_custom_call.1} parent=1 // loop_footer_branch
      %14 = sbr.rel target = $region3
    $region8: #{tpu_custom_call.1} parent=1 // loop_exit
      _
    %348 = vsyncpa [#allocation4], 1
    %s349 = scalar_lea.sflag [#allocation4], 1
    %350 = vsyncpa %s349, 1
    %351 = vsyncpa [#allocation5], 1
    %s352 = scalar_lea.sflag [#allocation5], 1
    %353 = vsyncpa %s352, 1
    %354 = vsyncpa [#allocation6], 1
    %s355 = scalar_lea.sflag [#allocation6], 1
    %356 = vsyncpa %s355, 1

</llo_original>
